<compile_context>
chip_gen: v7x
topology: tpu7x:2x2x1
jax: 0.10.0
libtpu: 0.0.40
codegen_flags: <defaults>
</compile_context>

<pallas_src>
import math
from functools import partial

import jax
import jax.numpy as jnp
from jax.experimental import pallas as pl
from jax.experimental.pallas import tpu as pltpu


# ------------------------------ schedules -----------------------------------
# TODO(synk): `linear` and `log_` are referenced but not defined in the source
# module; deterministic stand-in ramps are used here.
def linear(epoch):
    return min(epoch / 50.0, 1.0)


def log_(epoch):
    return math.log(epoch + 1.0) / math.log(51.0)


# ------------------------------ kernel ---------------------------------------
def _min_entropy_kernel(num_alpha_cols, w_ref, logla_ref, slab_ref, out_ref):
    """num_alpha_cols: static number of alpha columns in the fused slab."""
    # Scalar weights (SMEM): c2 = weight*weight1*weight2, c3 = weight*weight1*4.
    c2 = w_ref[0]
    c3 = w_ref[1]

    # ---- loss1: mean cross-entropy over the batch ---------------------------
    # logla = [logits | target-as-float]  (N, C+1).  CE_i = lse_i - logits_i[t_i]
    la = logla_ref[...].astype(jnp.float32)
    n, c1 = la.shape
    c = c1 - 1
    coli = jax.lax.broadcasted_iota(jnp.int32, (n, c1), 1)
    is_logit = coli < c
    # per-row target index: masked lane-sum of the appended column (exact, the
    # column holds small integer-valued floats).
    tgt_i = jnp.sum(jnp.where(coli == c, la, 0.0), axis=-1,
                    keepdims=True).astype(jnp.int32)                # (N, 1)
    lm = jnp.where(is_logit, la, jnp.float32(-1e30))                # mask tgt col
    mx = jnp.max(lm, axis=-1, keepdims=True)
    z = jnp.sum(jnp.exp(lm - mx), axis=-1, keepdims=True)
    target_logit = jnp.sum(jnp.where(coli == tgt_i, lm, 0.0),
                           axis=-1, keepdims=True)                  # (N, 1)
    loss1 = jnp.sum(jnp.log(z) + mx - target_logit) * (1.0 / n)

    # ---- fused alpha+beta entropy slab ---------------------------------------
    # slab (K, NA+NB): each column is one distribution, softmax axis = sublanes.
    xin = slab_ref[...].astype(jnp.float32)
    k, ncols = xin.shape
    col = jax.lax.broadcasted_iota(jnp.int32, (k, ncols), 1)
    is_alpha = col < num_alpha_cols
    xa = 2.0 * xin
    xa = jnp.where(xa < -1.0, xa * xa * xa, xa)       # streng_func
    xb = jnp.minimum(xin, 1.0)                        # streng_func2
    x = jnp.where(is_alpha, xa, xb)

    # one max/exp/sum/log chain for all 2E+6 distributions.
    mxc = jnp.max(x, axis=0, keepdims=True)           # (1, NCOLS)
    s = x - mxc
    e = jnp.exp(s)
    zc = jnp.sum(e, axis=0, keepdims=True)
    inv_z = pl.reciprocal(zc, approx=True)
    # sum_j a_j*log a_j per column == sum(e*s)/z - log z  (one recip per column)
    ent_col = jnp.sum(e * s, axis=0, keepdims=True) * inv_z - jnp.log(zc)

    col1 = jax.lax.broadcasted_iota(jnp.int32, (1, ncols), 1)
    is_alpha1 = col1 < num_alpha_cols
    ent_alpha = jnp.sum(jnp.where(is_alpha1, ent_col, 0.0))
    ent_beta = jnp.sum(jnp.where(is_alpha1, 0.0, ent_col))
    loss2 = -ent_alpha

    # beta distribution loss: 0.2*(sum of positive entries - 2)^2 per column.
    pos_sum = jnp.sum(jnp.where(x > 0.0, x, 0.0), axis=0, keepdims=True)
    dis_col = 0.2 * (pos_sum - 2.0) ** 2
    dis = jnp.sum(jnp.where(is_alpha1, 0.0, dis_col))
    loss3 = dis - ent_beta

    # ---- fused final weighting ----------------------------------------------
    wloss2 = c2 * loss2
    wloss3 = c3 * loss3
    out_ref[0] = loss1 + wloss2 + wloss3
    out_ref[1] = wloss2
    out_ref[2] = wloss3


def _min_entropy_pallas(weights, logla, slab, num_alpha_cols):
    """Returns jnp.float32[3] = (loss, wloss2, wloss3) from one pallas_call."""
    kernel = partial(_min_entropy_kernel, num_alpha_cols)
    return pl.pallas_call(
        kernel,
        out_shape=jax.ShapeDtypeStruct((3,), jnp.float32),
        in_specs=[
            pl.BlockSpec(memory_space=pltpu.MemorySpace.SMEM),  # weights (2,)
            pl.BlockSpec(memory_space=pltpu.MemorySpace.VMEM),  # logits|target (N, C+1)
            pl.BlockSpec(memory_space=pltpu.MemorySpace.VMEM),  # alpha+beta slab (K, NA+NB)
        ],
        out_specs=pl.BlockSpec(memory_space=pltpu.MemorySpace.SMEM),
    )(weights, logla, slab)


@jax.jit
def _min_entropy_forward(logits, target, alpha, beta, c2, c3):
    n, _ = logits.shape

    # Fold target into the logits transfer as one extra integer-valued column
    # (exact for class counts representable in the logits dtype).
    tgt_col = target.astype(logits.dtype).reshape(n, 1)
    logla = jnp.concatenate([logits, tgt_col], axis=-1)            # (N, C+1)

    # Fuse alpha (2,E,K) and beta (2,3,KB) into one sublane-dense slab:
    # columns = distributions, sublanes = softmax axis.
    two_a, e, k = alpha.shape
    two_b, nb, kb = beta.shape
    a2 = alpha.reshape(two_a * e, k)
    b2 = beta.reshape(two_b * nb, kb)
    kmax = max(k, kb)
    pad_val = -1e10  # safe: exp(streng(pad)) == 0 exactly, and pad**3 stays finite
    if k < kmax:
        a2 = jnp.pad(a2, ((0, 0), (0, kmax - k)), constant_values=pad_val)
    if kb < kmax:
        b2 = jnp.pad(b2, ((0, 0), (0, kmax - kb)), constant_values=pad_val)
    slab = jnp.concatenate([a2, b2], axis=0).T                     # (kmax, 2E+6)
    num_alpha_cols = two_a * e

    weights = jnp.stack([c2, c3]).astype(jnp.float32)              # (2,) SMEM
    parts = _min_entropy_pallas(weights, logla, slab, num_alpha_cols)
    return parts[0], parts[1], parts[2]


# ------------------------------ module wrapper --------------------------------
class MinEntropyLoss:
    def __init__(self, weight=0.1, interval=8):
        self.weight = weight
        self.interval = interval

    def __call__(self, inputs, target, alpha, beta, epoch=1):
        weight1 = linear(epoch)
        weight2 = log_(epoch)
        c2 = self.weight * weight1 * weight2
        c3 = self.weight * weight1 * 4.0
        return _min_entropy_forward(inputs, target, alpha, beta,
                                    jnp.float32(c2), jnp.float32(c3))


# ------------------------------ pure-JAX reference ----------------------------
def _ref_forward(logits, target, alpha, beta, c2, c3):
    log_p = jax.nn.log_softmax(logits.astype(jnp.float32), axis=-1)
    loss1 = -jnp.mean(jnp.take_along_axis(log_p, target[:, None], axis=-1))

    def streng(t):
        x = 2.0 * t
        return jnp.where(x < -1.0, x ** 3, x)

    def ent(x):
        a = jax.nn.softmax(x, axis=-1)
        return jnp.sum(a * jnp.log(a))

    loss2 = -ent(streng(alpha[0])) - ent(streng(alpha[1]))

    def beta_l(b):
        bb = jnp.where(b < 1.0, b, 1.0)
        dis = jnp.sum(0.2 * (jnp.sum(jnp.where(bb > 0.0, bb, 0.0), axis=-1) - 2.0) ** 2)
        return dis, ent(bb)

    d1, e1 = beta_l(beta[0])
    d2, e2 = beta_l(beta[1])
    loss3 = d1 + d2 - e1 - e2
    return (loss1 + c2 * loss2 + c3 * loss3, c2 * loss2, c3 * loss3)


# ------------------------------ main -----------------------------------------
if __name__ == "__main__":
    key = jax.random.PRNGKey(0)
    k_logits, k_target, k_alpha, k_beta = jax.random.split(key, 4)

    N, C = 8, 16          # batch, num classes
    E, K = 14, 8          # DARTS-like alpha: 14 edges x 8 ops
    KB = 8                # beta: 3 nodes x 8 candidate edges (per cell type)

    logits = jax.random.normal(k_logits, (N, C), dtype=jnp.float32)
    target = jax.random.randint(k_target, (N,), 0, C, dtype=jnp.int32)
    alpha = 0.5 * jax.random.normal(k_alpha, (2, E, K), dtype=jnp.float32)
    beta = 0.5 * jax.random.normal(k_beta, (2, 3, KB), dtype=jnp.float32) + 0.5

    crit = MinEntropyLoss(weight=0.1, interval=8)
    epoch = 5
    loss, wloss2, wloss3 = crit(logits, target, alpha, beta, epoch=epoch)
    jax.block_until_ready((loss, wloss2, wloss3))

    # sanity check against a pure-JAX reference of the same math
    # (tolerance loosened vs 1e-5 because of pl.reciprocal(approx=True))
    w1, w2 = linear(epoch), log_(epoch)
    c2 = jnp.float32(crit.weight * w1 * w2)
    c3 = jnp.float32(crit.weight * w1 * 4.0)
    ref_loss, ref_w2, ref_w3 = _ref_forward(logits, target, alpha, beta, c2, c3)
    got = jnp.stack([loss, wloss2, wloss3])
    ref = jnp.stack([ref_loss, ref_w2, ref_w3])
    assert jnp.allclose(got, ref, rtol=5e-3, atol=5e-3), (got, ref)

    print("KERNEL_OK")
</pallas_src>

<mosaic_0001>
module attributes {stable_mosaic.version = 11 : i64} {
  func.func @_min_entropy_kernel(%arg0: memref<2xf32, #tpu.memory_space<smem>>, %arg1: memref<8x17xf32, #tpu.memory_space<vmem>>, %arg2: memref<8x34xf32, #tpu.memory_space<vmem>>, %arg3: memref<3xf32, #tpu.memory_space<smem>>) attributes {dimension_semantics = [], scalar_prefetch = 0 : i64, scratch_operands = 0 : i64, tpu.core_type = #tpu.core_type<tc>} {
    %c0 = arith.constant 0 : index
    %0 = memref.load %arg0[%c0] : memref<2xf32, #tpu.memory_space<smem>>
    %c1 = arith.constant 1 : index
    %1 = memref.load %arg0[%c1] : memref<2xf32, #tpu.memory_space<smem>>
    %c0_0 = arith.constant 0 : index
    %c0_1 = arith.constant 0 : index
    %2 = vector.load %arg1[%c0_0, %c0_1] : memref<8x17xf32, #tpu.memory_space<vmem>>, vector<8x17xf32>
    %3 = tpu.iota {dimensions = array<i32: 1>} : vector<8x17xi32>
    %c16_i32 = arith.constant 16 : i32
    %4 = vector.broadcast %c16_i32 : i32 to vector<8x17xi32>
    %5 = arith.cmpi slt, %3, %4 : vector<8x17xi32>
    %c16_i32_2 = arith.constant 16 : i32
    %6 = vector.broadcast %c16_i32_2 : i32 to vector<8x17xi32>
    %7 = arith.cmpi eq, %3, %6 : vector<8x17xi32>
    %cst = arith.constant 0.000000e+00 : f32
    %8 = vector.broadcast %cst : f32 to vector<8x17xf32>
    %9 = arith.select %7, %2, %8 : vector<8x17xi1>, vector<8x17xf32>
    %cst_3 = arith.constant dense<0.000000e+00> : vector<8xf32>
    %10 = vector.multi_reduction <add>, %9, %cst_3 [1] : vector<8x17xf32> to vector<8xf32>
    %11 = vector.shape_cast %10 : vector<8xf32> to vector<8x1xf32>
    %12 = arith.fptosi %11 : vector<8x1xf32> to vector<8x1xi32>
    %cst_4 = arith.constant -1.000000e+30 : f32
    %13 = vector.broadcast %cst_4 : f32 to vector<8x17xf32>
    %14 = arith.select %5, %2, %13 : vector<8x17xi1>, vector<8x17xf32>
    %cst_5 = arith.constant dense<0xFF800000> : vector<8xf32>
    %15 = vector.multi_reduction <maximumf>, %14, %cst_5 [1] : vector<8x17xf32> to vector<8xf32>
    %16 = vector.shape_cast %15 : vector<8xf32> to vector<8x1xf32>
    %17 = vector.broadcast %16 : vector<8x1xf32> to vector<8x17xf32>
    %18 = arith.subf %14, %17 : vector<8x17xf32>
    %19 = math.exp %18 : vector<8x17xf32>
    %cst_6 = arith.constant dense<0.000000e+00> : vector<8xf32>
    %20 = vector.multi_reduction <add>, %19, %cst_6 [1] : vector<8x17xf32> to vector<8xf32>
    %21 = vector.shape_cast %20 : vector<8xf32> to vector<8x1xf32>
    %22 = vector.broadcast %12 : vector<8x1xi32> to vector<8x17xi32>
    %23 = arith.cmpi eq, %3, %22 : vector<8x17xi32>
    %cst_7 = arith.constant 0.000000e+00 : f32
    %24 = vector.broadcast %cst_7 : f32 to vector<8x17xf32>
    %25 = arith.select %23, %14, %24 : vector<8x17xi1>, vector<8x17xf32>
    %cst_8 = arith.constant dense<0.000000e+00> : vector<8xf32>
    %26 = vector.multi_reduction <add>, %25, %cst_8 [1] : vector<8x17xf32> to vector<8xf32>
    %27 = vector.shape_cast %26 : vector<8xf32> to vector<8x1xf32>
    %28 = math.log %21 : vector<8x1xf32>
    %29 = arith.addf %28, %16 : vector<8x1xf32>
    %30 = arith.subf %29, %27 : vector<8x1xf32>
    %31 = vector.shape_cast %30 : vector<8x1xf32> to vector<1x8x1xf32>
    %cst_9 = arith.constant dense<0.000000e+00> : vector<1xf32>
    %32 = vector.multi_reduction <add>, %31, %cst_9 [1, 2] : vector<1x8x1xf32> to vector<1xf32>
    %33 = vector.shape_cast %32 : vector<1xf32> to vector<1x1x1xf32>
    %34 = vector.extract %33[0, 0, 0] : f32 from vector<1x1x1xf32>
    %cst_10 = arith.constant 1.250000e-01 : f32
    %35 = arith.mulf %34, %cst_10 : f32
    %c0_11 = arith.constant 0 : index
    %c0_12 = arith.constant 0 : index
    %36 = vector.load %arg2[%c0_11, %c0_12] : memref<8x34xf32, #tpu.memory_space<vmem>>, vector<8x34xf32>
    %37 = tpu.iota {dimensions = array<i32: 1>} : vector<8x34xi32>
    %c28_i32 = arith.constant 28 : i32
    %38 = vector.broadcast %c28_i32 : i32 to vector<8x34xi32>
    %39 = arith.cmpi slt, %37, %38 : vector<8x34xi32>
    %cst_13 = arith.constant 2.000000e+00 : f32
    %40 = vector.broadcast %cst_13 : f32 to vector<8x34xf32>
    %41 = arith.mulf %40, %36 : vector<8x34xf32>
    %cst_14 = arith.constant -1.000000e+00 : f32
    %42 = vector.broadcast %cst_14 : f32 to vector<8x34xf32>
    %43 = arith.cmpf olt, %41, %42 : vector<8x34xf32>
    %44 = arith.mulf %41, %41 : vector<8x34xf32>
    %45 = arith.mulf %44, %41 : vector<8x34xf32>
    %46 = arith.select %43, %45, %41 : vector<8x34xi1>, vector<8x34xf32>
    %cst_15 = arith.constant 1.000000e+00 : f32
    %47 = vector.broadcast %cst_15 : f32 to vector<8x34xf32>
    %48 = arith.minimumf %36, %47 : vector<8x34xf32>
    %49 = arith.select %39, %46, %48 : vector<8x34xi1>, vector<8x34xf32>
    %cst_16 = arith.constant dense<0xFF800000> : vector<34xf32>
    %50 = vector.multi_reduction <maximumf>, %49, %cst_16 [0] : vector<8x34xf32> to vector<34xf32>
    %51 = vector.shape_cast %50 : vector<34xf32> to vector<1x34xf32>
    %52 = vector.broadcast %51 : vector<1x34xf32> to vector<8x34xf32>
    %53 = arith.subf %49, %52 : vector<8x34xf32>
    %54 = math.exp %53 : vector<8x34xf32>
    %cst_17 = arith.constant dense<0.000000e+00> : vector<34xf32>
    %55 = vector.multi_reduction <add>, %54, %cst_17 [0] : vector<8x34xf32> to vector<34xf32>
    %56 = vector.shape_cast %55 : vector<34xf32> to vector<1x34xf32>
    %57 = tpu.reciprocal %56 {approx = true} : vector<1x34xf32> -> vector<1x34xf32>
    %58 = arith.mulf %54, %53 : vector<8x34xf32>
    %cst_18 = arith.constant dense<0.000000e+00> : vector<34xf32>
    %59 = vector.multi_reduction <add>, %58, %cst_18 [0] : vector<8x34xf32> to vector<34xf32>
    %60 = vector.shape_cast %59 : vector<34xf32> to vector<1x34xf32>
    %61 = arith.mulf %60, %57 : vector<1x34xf32>
    %62 = math.log %56 : vector<1x34xf32>
    %63 = arith.subf %61, %62 : vector<1x34xf32>
    %64 = tpu.iota {dimensions = array<i32: 1>} : vector<1x34xi32>
    %c28_i32_19 = arith.constant 28 : i32
    %65 = vector.broadcast %c28_i32_19 : i32 to vector<1x34xi32>
    %66 = arith.cmpi slt, %64, %65 : vector<1x34xi32>
    %cst_20 = arith.constant 0.000000e+00 : f32
    %67 = vector.broadcast %cst_20 : f32 to vector<1x34xf32>
    %68 = arith.select %66, %63, %67 : vector<1x34xi1>, vector<1x34xf32>
    %69 = vector.shape_cast %68 : vector<1x34xf32> to vector<1x1x34xf32>
    %cst_21 = arith.constant dense<0.000000e+00> : vector<1xf32>
    %70 = vector.multi_reduction <add>, %69, %cst_21 [1, 2] : vector<1x1x34xf32> to vector<1xf32>
    %71 = vector.shape_cast %70 : vector<1xf32> to vector<1x1x1xf32>
    %72 = vector.extract %71[0, 0, 0] : f32 from vector<1x1x1xf32>
    %cst_22 = arith.constant 0.000000e+00 : f32
    %73 = vector.broadcast %cst_22 : f32 to vector<1x34xf32>
    %74 = arith.select %66, %73, %63 : vector<1x34xi1>, vector<1x34xf32>
    %75 = vector.shape_cast %74 : vector<1x34xf32> to vector<1x1x34xf32>
    %cst_23 = arith.constant dense<0.000000e+00> : vector<1xf32>
    %76 = vector.multi_reduction <add>, %75, %cst_23 [1, 2] : vector<1x1x34xf32> to vector<1xf32>
    %77 = vector.shape_cast %76 : vector<1xf32> to vector<1x1x1xf32>
    %78 = vector.extract %77[0, 0, 0] : f32 from vector<1x1x1xf32>
    %cst_24 = arith.constant 0.000000e+00 : f32
    %79 = arith.subf %cst_24, %72 : f32
    %cst_25 = arith.constant 0.000000e+00 : f32
    %80 = vector.broadcast %cst_25 : f32 to vector<8x34xf32>
    %81 = arith.cmpf ogt, %49, %80 : vector<8x34xf32>
    %cst_26 = arith.constant 0.000000e+00 : f32
    %82 = vector.broadcast %cst_26 : f32 to vector<8x34xf32>
    %83 = arith.select %81, %49, %82 : vector<8x34xi1>, vector<8x34xf32>
    %cst_27 = arith.constant dense<0.000000e+00> : vector<34xf32>
    %84 = vector.multi_reduction <add>, %83, %cst_27 [0] : vector<8x34xf32> to vector<34xf32>
    %85 = vector.shape_cast %84 : vector<34xf32> to vector<1x34xf32>
    %cst_28 = arith.constant 2.000000e+00 : f32
    %86 = vector.broadcast %cst_28 : f32 to vector<1x34xf32>
    %87 = arith.subf %85, %86 : vector<1x34xf32>
    %88 = arith.mulf %87, %87 : vector<1x34xf32>
    %cst_29 = arith.constant 2.000000e-01 : f32
    %89 = vector.broadcast %cst_29 : f32 to vector<1x34xf32>
    %90 = arith.mulf %89, %88 : vector<1x34xf32>
    %cst_30 = arith.constant 0.000000e+00 : f32
    %91 = vector.broadcast %cst_30 : f32 to vector<1x34xf32>
    %92 = arith.select %66, %91, %90 : vector<1x34xi1>, vector<1x34xf32>
    %93 = vector.shape_cast %92 : vector<1x34xf32> to vector<1x1x34xf32>
    %cst_31 = arith.constant dense<0.000000e+00> : vector<1xf32>
    %94 = vector.multi_reduction <add>, %93, %cst_31 [1, 2] : vector<1x1x34xf32> to vector<1xf32>
    %95 = vector.shape_cast %94 : vector<1xf32> to vector<1x1x1xf32>
    %96 = vector.extract %95[0, 0, 0] : f32 from vector<1x1x1xf32>
    %97 = arith.subf %96, %78 : f32
    %98 = arith.mulf %0, %79 : f32
    %99 = arith.mulf %1, %97 : f32
    %100 = arith.addf %35, %98 : f32
    %101 = arith.addf %100, %99 : f32
    %c0_32 = arith.constant 0 : index
    %102 = memref.load %arg3[%c0_32] : memref<3xf32, #tpu.memory_space<smem>>
    memref.store %101, %arg3[%c0_32] : memref<3xf32, #tpu.memory_space<smem>>
    %c1_33 = arith.constant 1 : index
    %103 = memref.load %arg3[%c1_33] : memref<3xf32, #tpu.memory_space<smem>>
    memref.store %98, %arg3[%c1_33] : memref<3xf32, #tpu.memory_space<smem>>
    %c2 = arith.constant 2 : index
    %104 = memref.load %arg3[%c2] : memref<3xf32, #tpu.memory_space<smem>>
    memref.store %99, %arg3[%c2] : memref<3xf32, #tpu.memory_space<smem>>
    return
  }
}

</mosaic_0001>

<llo_original>
// kernel: _min_entropy_forward.1
$region0: #{_min_entropy_forward.1}
  #allocation0 [shape = 'u32[]', space=smem, size = 0x4, offset = 0x4, fixed_abs, tag = 'smem constant byte address 0x4 - core index']
  #allocation1 [shape = 'u32[144,128]{1,0:T(1,128)}', space=vmem, size = 0x12000, scoped, tag = 'internal scratch']
  %s0 = inlined_call_operand.vmem [shape: f32[2], index: 0, kind: input, shape index: {}]
  %s1 = inlined_call_operand.vmem [shape: f32[8,17], index: 1, kind: input, shape index: {}]
  %s2 = inlined_call_operand.vmem [shape: f32[8,34], index: 2, kind: input, shape index: {}]
  %s3 = inlined_call_operand.vmem [shape: f32[3], index: 3, kind: output, shape index: {}]
  %s4 = sld [smem:[#allocation0]]
  $region26: #{_min_entropy_forward.1} parent=0
    _
  %s6 = ssub.s32 1, %s4
  %s7 = scalar_select 0, %s6, %s4
  $region1: #{_min_entropy_forward.1} parent=0
    #allocation2 [shape = 'u8[512]{0}', space=smem, size = 0x200, scoped, tag = 'input window, operand 0, single buffered']
    #allocation3 [shape = 's32[1]{0}', space=sflag, size = 0x4, scoped, tag = 'scoped memory for _min_entropy_forward.1']
    #allocation4 [shape = 's32[1]{0}', space=sflag, size = 0x4, scoped, tag = 'scoped memory for _min_entropy_forward.1']
    #allocation5 [shape = 'u8[512]{0}', space=smem, size = 0x200, scoped, tag = 'output window, operand 0, single buffered']
    %8 = vsyncpa [#allocation3], 0
    %9 = vsyncpa [#allocation4], 0
    // Predicated region
    $region2: #{_min_entropy_forward.1} parent=1 // pred_check
      _
    $region3: #{_min_entropy_forward.1} parent=1 // pred_check_branch
      %11 = sbr.rel (0) target = $region5
    $region4: #{_min_entropy_forward.1} parent=1 // pred_region
      %s13 = ssub.s32 16, 16
      %14 = vsyncadd [#allocation3], %s13
      %s16 = sshll.u32 %s0, 4
      %s17 = int_to_ptr.vmem [resolvable:$true] %s16
      %19 = dma.vmem_to_smem %s17, 16, [#allocation2], [#allocation3]
    $region5: #{_min_entropy_forward.1} parent=1 // pred_fallthru
      _
    // Predicated region
    $region6: #{_min_entropy_forward.1} parent=1 // pred_check
      _
    $region7: #{_min_entropy_forward.1} parent=1 // pred_check_branch
      %21 = sbr.rel (0) target = $region9
    $region8: #{_min_entropy_forward.1} parent=1 // pred_region
      _
    $region9: #{_min_entropy_forward.1} parent=1 // pred_fallthru
      _
    // Predicated region
    $region10: #{_min_entropy_forward.1} parent=1 // pred_check
      _
    $region11: #{_min_entropy_forward.1} parent=1 // pred_check_branch
      %23 = sbr.rel (0) target = $region13
    $region12: #{_min_entropy_forward.1} parent=1 // pred_region
      _
    $region13: #{_min_entropy_forward.1} parent=1 // pred_fallthru
      _
    // Predicated region
    $region14: #{_min_entropy_forward.1} parent=1 // pred_check
      _
    $region15: #{_min_entropy_forward.1} parent=1 // pred_check_branch
      %25 = sbr.rel (0) target = $region17
    $region16: #{_min_entropy_forward.1} parent=1 // pred_region
      %26 = dma.done [#allocation3], 16
    $region17: #{_min_entropy_forward.1} parent=1 // pred_fallthru
      _
    %27 = sfence
    %s28 = sld [smem:[#allocation2]]
    %s29 = sld [smem:[#allocation2 + $0x1]]
    %v30 = vld [vmem:[%s1] sm:$0xff]
    %v31 = vlaneseq
    %v32 = vand.u32 %v31, 127
    %vm33 = vcmp.lt.s32.totalorder %v32, 16
    %vm34 = vcmp.eq.s32.totalorder %v32, 16
    %v35 = vsel %vm34, %v30, 0.0
    %vm36 = vcmask 138240
    %v37 = vsel %vm36, %v35, 0.0
    %38 = vadd.xlane.f32.xlu0 %v37
    %v39 = vpop.xlane.xlu0 %38
    %v40 = vcvt.f32.s32.to.zero.pseudo %v39
    %v41 = vsel %vm33, %v30, -1e+30
    %v42 = vsel %vm36, %v41, -inf
    %43 = vmax.xlane.f32.xlu0 %v42
    %v44 = vpop.xlane.xlu0 %43
    %v45 = vsub.f32 %v41, %v44
    %v46 = vmul.f32 %v45, 1.442695
    %v47 = vpow.pop %v46
    %v48 = vsel %vm36, %v47, 0.0
    %49 = vadd.xlane.f32.xlu0 %v48
    %v50 = vpop.xlane.xlu0 %49
    %vm51 = vcmp.eq.s32.totalorder %v32, %v40
    %v52 = vsel %vm51, %v41, 0.0
    %v53 = vsel %vm36, %v52, 0.0
    %54 = vadd.xlane.f32.xlu0 %v53
    %v55 = vpop.xlane.xlu0 %54
    %v56 = vlog2.pop %v50
    %v57 = vmul.f32 %v56, 0.6931472
    %v58 = vadd.f32 %v57, %v44
    %v59 = vsub.f32 %v58, %v55
    %vm60 = vcmask 7168
    %v61 = vsel %vm60, %v59, 0.0
    %62 = vadd.xlane.f32.xlu0 %v61
    %v63 = vpop.xlane.xlu0 %62
    %v64 = vrot.slane %v63, 4
    %v65 = vadd.f32 %v63, %v64
    %v66 = vrot.slane %v65, 2
    %v67 = vadd.f32 %v65, %v66
    %v68 = vrot.slane %v67, 1
    %v69 = vadd.f32 %v67, %v68
    %s70 = vtos %v69
    %s71 = smul.f32 %s70, 0.125
    %v72 = vld [vmem:[%s2] sm:$0xff]
    %vm73 = vcmp.lt.s32.totalorder %v32, 28
    %v74 = vmul.f32 %v72, 2.0
    %vm75 = vcmp.lt.f32.partialorder %v74, -1.0
    %v76 = vmul.f32 %v74, %v74
    %v77 = vmul.f32 %v76, %v74
    %v78 = vsel %vm75, %v77, %v74
    %v79 = vmin.f32 %v72, 1.0
    %v80 = vsel %vm73, %v78, %v79
    %vm81 = vcmask 277504
    %v82 = vsel %vm81, %v80, -inf
    %v83 = vrot.slane %v82, 4
    %v84 = vmax.f32 %v82, %v83
    %v85 = vrot.slane %v84, 2
    %v86 = vmax.f32 %v84, %v85
    %v87 = vrot.slane %v86, 1
    %v88 = vmax.f32 %v86, %v87
    %v89 = vsub.f32 %v80, %v88
    %v90 = vmul.f32 %v89, 1.442695
    %v91 = vpow.pop %v90
    %v92 = vsel %vm81, %v91, 0.0
    %v93 = vrot.slane %v92, 4
    %v94 = vadd.f32 %v92, %v93
    %v95 = vrot.slane %v94, 2
    %v96 = vadd.f32 %v94, %v95
    %v97 = vrot.slane %v96, 1
    %v98 = vadd.f32 %v96, %v97
    %v99 = vrcp.pop %v98
    %v100 = vmul.f32 %v91, %v89
    %v101 = vsel %vm81, %v100, 0.0
    %v102 = vrot.slane %v101, 4
    %v103 = vadd.f32 %v101, %v102
    %v104 = vrot.slane %v103, 2
    %v105 = vadd.f32 %v103, %v104
    %v106 = vrot.slane %v105, 1
    %v107 = vadd.f32 %v105, %v106
    %v108 = vmul.f32 %v107, %v99
    %v109 = vlog2.pop %v98
    %v110 = vmul.f32 %v109, 0.6931472
    %v111 = vsub.f32 %v108, %v110
    %v112 = vsel %vm73, %v111, 0.0
    %vm113 = vcmask 270336
    %v114 = vsel %vm113, %v112, 0.0
    %115 = vadd.xlane.f32.xlu0 %v114
    %v116 = vpop.xlane.xlu0 %115
    %v117 = vrot.slane %v116, 4
    %v118 = vadd.f32 %v116, %v117
    %v119 = vrot.slane %v118, 2
    %v120 = vadd.f32 %v118, %v119
    %v121 = vrot.slane %v120, 1
    %v122 = vadd.f32 %v120, %v121
    %s123 = vtos %v122
    %v124 = vsel %vm73, 0.0, %v111
    %v125 = vsel %vm113, %v124, 0.0
    %126 = vadd.xlane.f32.xlu0 %v125
    %v127 = vpop.xlane.xlu0 %126
    %v128 = vrot.slane %v127, 4
    %v129 = vadd.f32 %v127, %v128
    %v130 = vrot.slane %v129, 2
    %v131 = vadd.f32 %v129, %v130
    %v132 = vrot.slane %v131, 1
    %v133 = vadd.f32 %v131, %v132
    %s134 = vtos %v133
    %s135 = ssub.f32 0.0, %s123
    %vm136 = vcmp.gt.f32.partialorder %v80, 0.0
    %v137 = vsel %vm136, %v80, 0.0
    %v138 = vsel %vm81, %v137, 0.0
    %v139 = vrot.slane %v138, 4
    %v140 = vadd.f32 %v138, %v139
    %v141 = vrot.slane %v140, 2
    %v142 = vadd.f32 %v140, %v141
    %v143 = vrot.slane %v142, 1
    %v144 = vadd.f32 %v142, %v143
    %v145 = vsub.f32 %v144, 2.0
    %v146 = vmul.f32 %v145, %v145
    %v147 = vmul.f32 %v146, 0.2
    %v148 = vsel %vm73, 0.0, %v147
    %v149 = vsel %vm113, %v148, 0.0
    %150 = vadd.xlane.f32.xlu0 %v149
    %v151 = vpop.xlane.xlu0 %150
    %v152 = vrot.slane %v151, 4
    %v153 = vadd.f32 %v151, %v152
    %v154 = vrot.slane %v153, 2
    %v155 = vadd.f32 %v153, %v154
    %v156 = vrot.slane %v155, 1
    %v157 = vadd.f32 %v155, %v156
    %s158 = vtos %v157
    %s159 = ssub.f32 %s158, %s134
    %s160 = smul.f32 %s28, %s135
    %s161 = smul.f32 %s29, %s159
    %s162 = sadd.f32 %s71, %s160
    %s163 = sadd.f32 %s162, %s161
    %s164 = scalar_lea.smem [#allocation5], 0
    %165 = sst [smem:[%s164]] %s163
    %s166 = scalar_lea.smem [#allocation5], 1
    %167 = sst [smem:[%s166]] %s160
    %s168 = scalar_lea.smem [#allocation5], 2
    %169 = sst [smem:[%s168]] %s161
    // Predicated region
    $region18: #{_min_entropy_forward.1} parent=1 // pred_check
      _
    $region19: #{_min_entropy_forward.1} parent=1 // pred_check_branch
      %171 = sbr.rel (0) target = $region21
    $region20: #{_min_entropy_forward.1} parent=1 // pred_region
      %s173 = ssub.s32 16, 16
      %174 = vsyncadd [#allocation4], %s173
      %s176 = sshll.u32 %s3, 4
      %s177 = int_to_ptr.vmem [resolvable:$true] %s176
      %179 = dma.smem_to_vmem [#allocation5], 16, %s177, [#allocation4]
    $region21: #{_min_entropy_forward.1} parent=1 // pred_fallthru
      _
    // Predicated region
    $region22: #{_min_entropy_forward.1} parent=1 // pred_check
      _
    $region23: #{_min_entropy_forward.1} parent=1 // pred_check_branch
      %181 = sbr.rel (0) target = $region25
    $region24: #{_min_entropy_forward.1} parent=1 // pred_region
      %182 = dma.done [#allocation4], 16
    $region25: #{_min_entropy_forward.1} parent=1 // pred_fallthru
      _
    %183 = sfence
    %184 = vsyncpa [#allocation3], 1
    %185 = vsyncpa [#allocation4], 1

</llo_original>
